<compile_context>
chip_gen: v6e
topology: v6e:2x2x1
jax: 0.10.0
libtpu: 0.0.40
codegen_flags: <defaults>
</compile_context>

<pallas_src>
import functools

import jax
import jax.numpy as jnp
from jax.experimental import pallas as pl
from jax.experimental.pallas import tpu as pltpu


def _round_up(n, m):
    return ((n + m - 1) // m) * m


# ----------------------------- kernel ---------------------------------------


def vae_kernel(x_ref, eps_ref, p_ref, out_ref, *, d_in, hidden, latent, rows):
    """One fused VAE forward step on a (TILE_B, ...) batch tile."""
    row_w1, row_wh, row_w3, row_w4, row_b = rows

    # Static slices of the packed parameter slab (all row starts are 8-aligned,
    # all lane starts are 0 -> no cross-vreg shuffles).
    w1 = p_ref[row_w1:row_w1 + d_in, :hidden]          # [D_in, H]
    wh = p_ref[row_wh:row_wh + hidden, :2 * latent]    # [H, 2Z]  (mu || logvar)
    w3 = p_ref[row_w3:row_w3 + latent, :hidden]        # [Z, H]
    w4 = p_ref[row_w4:row_w4 + hidden, :d_in]          # [H, D_in]
    bias_blk = p_ref[row_b:row_b + 8, :]                # [8, 128] bias block
    b1 = bias_blk[0:1, :hidden]
    bh = bias_blk[1:2, :2 * latent]
    b3 = bias_blk[2:3, :hidden]
    b4 = bias_blk[3:4, :d_in]

    x = x_ref[...]
    eps = eps_ref[...]

    # ---------------- encoder ----------------
    h = jnp.dot(x, w1, preferred_element_type=jnp.float32)
    h = jnp.maximum(h + b1, 0.0)

    # merged mu||logvar head: one [H, 2Z] matmul instead of two [H, Z] ones.
    muvar = jnp.dot(h, wh, preferred_element_type=jnp.float32) + bh
    z_mu = muvar[:, :latent]
    z_var = muvar[:, latent:]

    # ---------------- reparameterization ----------------
    # eps ~ N(0,1) supplied by the wrapper (same stream semantics as
    # torch.randn_like); exp rides the EUP.
    x_sample = eps * jnp.exp(0.5 * z_var) + z_mu

    # ---------------- decoder ----------------
    hd = jnp.dot(x_sample, w3, preferred_element_type=jnp.float32)
    hd = jnp.maximum(hd + b3, 0.0)
    logits = jnp.dot(hd, w4, preferred_element_type=jnp.float32) + b4
    # sigmoid via EUP exp + EUP approximate reciprocal (no VPU divide).
    predicted = pl.reciprocal(1.0 + jnp.exp(-logits), approx=True)

    # -------------- lane-dense packed output: [pred | mu | logvar | pad] ----
    packed = jnp.concatenate([predicted, muvar], axis=-1)
    pad = out_ref.shape[-1] - packed.shape[-1]
    if pad > 0:
        packed = jnp.concatenate(
            [packed, jnp.zeros((packed.shape[0], pad), jnp.float32)], axis=-1)
    out_ref[...] = packed


# ----------------------------- host-side packing ----------------------------


def pack_params(params, d_in, hidden, latent):
    """Pack all weights & biases into ONE lane-dense [R, 128k] f32 slab."""
    lanes = _round_up(max(hidden, 2 * latent, d_in), 128)
    row_w1 = 0
    row_wh = row_w1 + _round_up(d_in, 8)
    row_w3 = row_wh + _round_up(hidden, 8)
    row_w4 = row_w3 + _round_up(latent, 8)
    row_b = row_w4 + _round_up(hidden, 8)
    rows_total = row_b + 8                     # 8-row bias block (rows 0..3 used)

    slab = jnp.zeros((rows_total, lanes), jnp.float32)

    def put(s, r, a):
        return s.at[r:r + a.shape[0], :a.shape[1]].set(a)

    slab = put(slab, row_w1, params["w1"])
    slab = put(slab, row_wh, params["w_head"])
    slab = put(slab, row_w3, params["w3"])
    slab = put(slab, row_w4, params["w4"])
    slab = put(slab, row_b + 0, params["b1"])
    slab = put(slab, row_b + 1, params["b_head"])
    slab = put(slab, row_b + 2, params["b3"])
    slab = put(slab, row_b + 3, params["b4"])

    rows = (row_w1, row_wh, row_w3, row_w4, row_b)
    return slab, rows


# ----------------------------- wrapper --------------------------------------


def vae_forward(x, eps, param_slab, *, d_in, hidden, latent, rows, tile_b=8):
    """Returns (predicted, z_mu, z_var), matching the PyTorch VAE.forward."""
    B = x.shape[0]
    out_lanes = _round_up(d_in + 2 * latent, 128)   # lane-dense packed output
    R, LW = param_slab.shape

    tile_b = min(tile_b, B)
    assert B % tile_b == 0, "batch must be divisible by the batch tile"
    grid = (B // tile_b,)

    kernel = functools.partial(vae_kernel, d_in=d_in, hidden=hidden,
                               latent=latent, rows=rows)

    packed = pl.pallas_call(
        kernel,
        out_shape=jax.ShapeDtypeStruct((B, out_lanes), jnp.float32),
        grid=grid,
        in_specs=[
            pl.BlockSpec((tile_b, d_in), lambda i: (i, 0)),     # x tile
            pl.BlockSpec((tile_b, latent), lambda i: (i, 0)),   # eps tile
            pl.BlockSpec((R, LW), lambda i: (0, 0)),            # resident params
        ],
        out_specs=pl.BlockSpec((tile_b, out_lanes), lambda i: (i, 0)),
        compiler_params=pltpu.CompilerParams(
            dimension_semantics=("parallel",)),
    )(x, eps, param_slab)

    predicted = packed[:, :d_in]
    z_mu = packed[:, d_in:d_in + latent]
    z_var = packed[:, d_in + latent:d_in + 2 * latent]
    return predicted, z_mu, z_var


def init_params(key, d_in, hidden, latent):
    ks = jax.random.split(key, 4)
    scale = 0.05
    return {
        "w1": scale * jax.random.normal(ks[0], (d_in, hidden), jnp.float32),
        "b1": jnp.zeros((1, hidden), jnp.float32),
        # merged mu||logvar head: [hidden, 2*latent]
        "w_head": scale * jax.random.normal(ks[1], (hidden, 2 * latent),
                                            jnp.float32),
        "b_head": jnp.zeros((1, 2 * latent), jnp.float32),
        "w3": scale * jax.random.normal(ks[2], (latent, hidden), jnp.float32),
        "b3": jnp.zeros((1, hidden), jnp.float32),
        "w4": scale * jax.random.normal(ks[3], (hidden, d_in), jnp.float32),
        "b4": jnp.zeros((1, d_in), jnp.float32),
    }


if __name__ == "__main__":
    B, D_IN, HIDDEN, LATENT = 8, 64, 32, 16

    key = jax.random.PRNGKey(0)
    k_params, k_x, k_eps = jax.random.split(key, 3)

    params = init_params(k_params, D_IN, HIDDEN, LATENT)
    x = jax.random.normal(k_x, (B, D_IN), jnp.float32)
    eps = jax.random.normal(k_eps, (B, LATENT), jnp.float32)   # torch.randn_like

    param_slab, rows = pack_params(params, D_IN, HIDDEN, LATENT)

    fwd = jax.jit(functools.partial(vae_forward, d_in=D_IN, hidden=HIDDEN,
                                    latent=LATENT, rows=rows))
    predicted, z_mu, z_var = fwd(x, eps, param_slab)
    jax.block_until_ready((predicted, z_mu, z_var))

    # ---- pure-JAX reference (same eps, same math) for a tolerance check ----
    hp = jax.lax.Precision.HIGHEST
    h = jax.nn.relu(jnp.dot(x, params["w1"], precision=hp) + params["b1"])
    muvar_r = jnp.dot(h, params["w_head"], precision=hp) + params["b_head"]
    mu_r, var_r = muvar_r[:, :LATENT], muvar_r[:, LATENT:]
    xs = eps * jnp.exp(0.5 * var_r) + mu_r
    hd = jax.nn.relu(jnp.dot(xs, params["w3"], precision=hp) + params["b3"])
    pred_r = jax.nn.sigmoid(jnp.dot(hd, params["w4"], precision=hp) + params["b4"])

    assert predicted.shape == (B, D_IN) and predicted.dtype == jnp.float32
    assert z_mu.shape == (B, LATENT) and z_var.shape == (B, LATENT)
    assert bool(jnp.all(jnp.isfinite(predicted)))
    assert bool(jnp.all(jnp.isfinite(z_mu))) and bool(jnp.all(jnp.isfinite(z_var)))
    assert bool(jnp.allclose(z_mu, mu_r, atol=1e-3, rtol=1e-2))
    assert bool(jnp.allclose(z_var, var_r, atol=1e-3, rtol=1e-2))
    # predicted uses the approximate EUP reciprocal -> looser tolerance
    assert bool(jnp.allclose(predicted, pred_r, atol=2e-2, rtol=0))
    assert bool(jnp.all((predicted >= -1e-3) & (predicted <= 1.0 + 1e-3)))

    print("KERNEL_OK")
</pallas_src>

<mosaic_0001>
module attributes {stable_mosaic.version = 11 : i64} {
  func.func @vae_kernel(%arg0: i32, %arg1: memref<8x64xf32, #tpu.memory_space<vmem>>, %arg2: memref<8x16xf32, #tpu.memory_space<vmem>>, %arg3: memref<152x128xf32, #tpu.memory_space<vmem>>, %arg4: memref<8x128xf32, #tpu.memory_space<vmem>>) attributes {dimension_semantics = [#tpu.dimension_semantics<parallel>], iteration_bounds = array<i64: 1>, scalar_prefetch = 0 : i64, scratch_operands = 0 : i64, tpu.core_type = #tpu.core_type<tc>, window_params = [{transform_indices = @transform_0, window_bounds = array<i64: 8, 64>}, {transform_indices = @transform_1, window_bounds = array<i64: 8, 16>}, {pipeline_mode = #tpu.pipeline_mode<synchronous>, transform_indices = @transform_2, window_bounds = array<i64: 152, 128>}, {transform_indices = @transform_3, window_bounds = array<i64: 8, 128>}]} {
    %c0 = arith.constant 0 : index
    %c0_0 = arith.constant 0 : index
    %0 = vector.load %arg3[%c0, %c0_0] : memref<152x128xf32, #tpu.memory_space<vmem>>, vector<64x32xf32>
    %c64 = arith.constant 64 : index
    %c0_1 = arith.constant 0 : index
    %1 = vector.load %arg3[%c64, %c0_1] : memref<152x128xf32, #tpu.memory_space<vmem>>, vector<32x32xf32>
    %c96 = arith.constant 96 : index
    %c0_2 = arith.constant 0 : index
    %2 = vector.load %arg3[%c96, %c0_2] : memref<152x128xf32, #tpu.memory_space<vmem>>, vector<16x32xf32>
    %c112 = arith.constant 112 : index
    %c0_3 = arith.constant 0 : index
    %3 = vector.load %arg3[%c112, %c0_3] : memref<152x128xf32, #tpu.memory_space<vmem>>, vector<32x64xf32>
    %c144 = arith.constant 144 : index
    %c0_4 = arith.constant 0 : index
    %4 = vector.load %arg3[%c144, %c0_4] : memref<152x128xf32, #tpu.memory_space<vmem>>, vector<8x128xf32>
    %5 = vector.extract_strided_slice %4 {offsets = [0, 0], sizes = [1, 32], strides = [1, 1]} : vector<8x128xf32> to vector<1x32xf32>
    %6 = vector.extract_strided_slice %4 {offsets = [1, 0], sizes = [1, 32], strides = [1, 1]} : vector<8x128xf32> to vector<1x32xf32>
    %7 = vector.extract_strided_slice %4 {offsets = [2, 0], sizes = [1, 32], strides = [1, 1]} : vector<8x128xf32> to vector<1x32xf32>
    %8 = vector.extract_strided_slice %4 {offsets = [3, 0], sizes = [1, 64], strides = [1, 1]} : vector<8x128xf32> to vector<1x64xf32>
    %c0_5 = arith.constant 0 : index
    %c0_6 = arith.constant 0 : index
    %9 = vector.load %arg1[%c0_5, %c0_6] : memref<8x64xf32, #tpu.memory_space<vmem>>, vector<8x64xf32>
    %c0_7 = arith.constant 0 : index
    %c0_8 = arith.constant 0 : index
    %10 = vector.load %arg2[%c0_7, %c0_8] : memref<8x16xf32, #tpu.memory_space<vmem>>, vector<8x16xf32>
    %cst = arith.constant dense<0.000000e+00> : vector<8x32xf32>
    %11 = tpu.matmul %9, %0, %cst {dimension_numbers = #tpu.dot_dimension_numbers<[1], [0], [0], [1], [0, 0, 1, 1], [], []>} : vector<8x64xf32>, vector<64x32xf32>, vector<8x32xf32> -> vector<8x32xf32>
    %12 = vector.broadcast %5 : vector<1x32xf32> to vector<8x32xf32>
    %13 = arith.addf %11, %12 : vector<8x32xf32>
    %cst_9 = arith.constant 0.000000e+00 : f32
    %14 = vector.broadcast %cst_9 : f32 to vector<8x32xf32>
    %15 = arith.maximumf %13, %14 : vector<8x32xf32>
    %cst_10 = arith.constant dense<0.000000e+00> : vector<8x32xf32>
    %16 = tpu.matmul %15, %1, %cst_10 {dimension_numbers = #tpu.dot_dimension_numbers<[1], [0], [0], [1], [0, 0, 1, 1], [], []>} : vector<8x32xf32>, vector<32x32xf32>, vector<8x32xf32> -> vector<8x32xf32>
    %17 = vector.broadcast %6 : vector<1x32xf32> to vector<8x32xf32>
    %18 = arith.addf %16, %17 : vector<8x32xf32>
    %19 = vector.extract_strided_slice %18 {offsets = [0, 0], sizes = [8, 16], strides = [1, 1]} : vector<8x32xf32> to vector<8x16xf32>
    %20 = vector.extract_strided_slice %18 {offsets = [0, 16], sizes = [8, 16], strides = [1, 1]} : vector<8x32xf32> to vector<8x16xf32>
    %cst_11 = arith.constant 5.000000e-01 : f32
    %21 = vector.broadcast %cst_11 : f32 to vector<8x16xf32>
    %22 = arith.mulf %21, %20 : vector<8x16xf32>
    %23 = math.exp %22 : vector<8x16xf32>
    %24 = arith.mulf %10, %23 : vector<8x16xf32>
    %25 = arith.addf %24, %19 : vector<8x16xf32>
    %cst_12 = arith.constant dense<0.000000e+00> : vector<8x32xf32>
    %26 = tpu.matmul %25, %2, %cst_12 {dimension_numbers = #tpu.dot_dimension_numbers<[1], [0], [0], [1], [0, 0, 1, 1], [], []>} : vector<8x16xf32>, vector<16x32xf32>, vector<8x32xf32> -> vector<8x32xf32>
    %27 = vector.broadcast %7 : vector<1x32xf32> to vector<8x32xf32>
    %28 = arith.addf %26, %27 : vector<8x32xf32>
    %cst_13 = arith.constant 0.000000e+00 : f32
    %29 = vector.broadcast %cst_13 : f32 to vector<8x32xf32>
    %30 = arith.maximumf %28, %29 : vector<8x32xf32>
    %cst_14 = arith.constant dense<0.000000e+00> : vector<8x64xf32>
    %31 = tpu.matmul %30, %3, %cst_14 {dimension_numbers = #tpu.dot_dimension_numbers<[1], [0], [0], [1], [0, 0, 1, 1], [], []>} : vector<8x32xf32>, vector<32x64xf32>, vector<8x64xf32> -> vector<8x64xf32>
    %32 = vector.broadcast %8 : vector<1x64xf32> to vector<8x64xf32>
    %33 = arith.addf %31, %32 : vector<8x64xf32>
    %cst_15 = arith.constant 0.000000e+00 : f32
    %34 = vector.broadcast %cst_15 : f32 to vector<8x64xf32>
    %35 = arith.subf %34, %33 : vector<8x64xf32>
    %36 = math.exp %35 : vector<8x64xf32>
    %cst_16 = arith.constant 1.000000e+00 : f32
    %37 = vector.broadcast %cst_16 : f32 to vector<8x64xf32>
    %38 = arith.addf %37, %36 : vector<8x64xf32>
    %39 = tpu.reciprocal %38 {approx = true} : vector<8x64xf32> -> vector<8x64xf32>
    %40 = tpu.concatenate %39, %18 in 1 : vector<8x64xf32>, vector<8x32xf32> -> vector<8x96xf32>
    %cst_17 = arith.constant 0.000000e+00 : f32
    %41 = vector.broadcast %cst_17 : f32 to vector<8x32xf32>
    %42 = tpu.concatenate %40, %41 in 1 : vector<8x96xf32>, vector<8x32xf32> -> vector<8x128xf32>
    %c0_18 = arith.constant 0 : index
    %c0_19 = arith.constant 0 : index
    %43 = vector.load %arg4[%c0_18, %c0_19] : memref<8x128xf32, #tpu.memory_space<vmem>>, vector<8x128xf32>
    tpu.vector_store %arg4[%c0_18, %c0_19], %42 {strides = array<i32>} : memref<8x128xf32, #tpu.memory_space<vmem>>, vector<8x128xf32>,
    return
  }
  func.func @transform_0(%arg0: i32) -> (i32, i32) {
    %c0_i32 = arith.constant 0 : i32
    %c0_i32_0 = arith.constant 0 : i32
    return %arg0, %c0_i32 : i32, i32
  }
  func.func @transform_1(%arg0: i32) -> (i32, i32) {
    %c0_i32 = arith.constant 0 : i32
    %c0_i32_0 = arith.constant 0 : i32
    return %arg0, %c0_i32 : i32, i32
  }
  func.func @transform_2(%arg0: i32) -> (i32, i32) {
    %c0_i32 = arith.constant 0 : i32
    %c0_i32_0 = arith.constant 0 : i32
    %c0_i32_1 = arith.constant 0 : i32
    return %c0_i32, %c0_i32_0 : i32, i32
  }
  func.func @transform_3(%arg0: i32) -> (i32, i32) {
    %c0_i32 = arith.constant 0 : i32
    %c0_i32_0 = arith.constant 0 : i32
    return %arg0, %c0_i32 : i32, i32
  }
}

</mosaic_0001>

<llo_original>
// kernel: vae_forward.1
$region0: #{vae_forward.1}
  #allocation0 [shape = 'u32[]', space=smem, size = 0x4, offset = 0x4, fixed_abs, tag = 'smem constant byte address 0x4 - core index']
  #allocation1 [shape = 'u32[144,128]{1,0:T(1,128)}', space=vmem, size = 0x12000, scoped, tag = 'internal scratch']
  %s0 = inlined_call_operand.hbm [shape: f32[8,64], index: 0, kind: input, shape index: {}]
  %s1 = inlined_call_operand.hbm [shape: f32[8,16], index: 1, kind: input, shape index: {}]
  %s2 = inlined_call_operand.hbm [shape: f32[152,128], index: 2, kind: input, shape index: {}]
  %s3 = inlined_call_operand.vmem [shape: f32[8,128], index: 3, kind: output, shape index: {}]
  %s4 = sld [smem:[#allocation0]]
  $region34: #{vae_forward.1} parent=0
    _
  %s6 = ssub.s32 1, %s4
  %s7 = scalar_select 0, %s6, %s4
  $region1: #{vae_forward.1} parent=0
    #allocation2 [shape = 'u8[4096]{0}', space=vmem, size = 0x1000, scoped, tag = 'input window, operand 0, single buffered']
    #allocation3 [shape = 's32[1]{0}', space=sflag, size = 0x4, scoped, tag = 'scoped memory for vae_forward.1']
    #allocation4 [shape = 'u8[4096]{0}', space=vmem, size = 0x1000, scoped, tag = 'input window, operand 1, single buffered']
    #allocation5 [shape = 's32[1]{0}', space=sflag, size = 0x4, scoped, tag = 'scoped memory for vae_forward.1']
    #allocation6 [shape = 'u8[77824]{0}', space=vmem, size = 0x13000, scoped, tag = 'input window, operand 2, single buffered']
    %8 = vsyncpa [#allocation3], 0
    %9 = vsyncpa [#allocation5], 0
    // Predicated region
    $region2: #{vae_forward.1} parent=1 // pred_check
      _
    $region3: #{vae_forward.1} parent=1 // pred_check_branch
      %11 = sbr.rel (0) target = $region5
    $region4: #{vae_forward.1} parent=1 // pred_region
      %s13 = ssub.s32 128, 128
      %14 = vsyncadd [#allocation3], %s13
      %s16 = sshll.u32 [#allocation2], 4
      %s17 = int_to_ptr.vmem [resolvable:$true] %s16
      %19 = dma.hbm_to_vmem [thread:$0]  %s0, 128, %s17, [#allocation3]
    $region5: #{vae_forward.1} parent=1 // pred_fallthru
      _
    // Predicated region
    $region6: #{vae_forward.1} parent=1 // pred_check
      _
    $region7: #{vae_forward.1} parent=1 // pred_check_branch
      %21 = sbr.rel (0) target = $region9
    $region8: #{vae_forward.1} parent=1 // pred_region
      %s23 = ssub.s32 128, 128
      %24 = vsyncadd [#allocation5], %s23
      %s26 = sshll.u32 [#allocation4], 4
      %s27 = int_to_ptr.vmem [resolvable:$true] %s26
      %29 = dma.hbm_to_vmem [thread:$0]  %s1, 128, %s27, [#allocation5]
    $region9: #{vae_forward.1} parent=1 // pred_fallthru
      _
    // Predicated region
    $region10: #{vae_forward.1} parent=1 // pred_check
      _
    $region11: #{vae_forward.1} parent=1 // pred_check_branch
      %31 = sbr.rel (0) target = $region13
    $region12: #{vae_forward.1} parent=1 // pred_region
      %s33 = ssub.s32 2432, 2432
      %34 = vsyncadd [#allocation5], %s33
      %s35 = sshll.u32 [#allocation6], 4
      %s36 = int_to_ptr.vmem [resolvable:$true] %s35
      %41 = dma.hbm_to_vmem [thread:$0]  %s2, 2432, %s36, [#allocation5], 128, 128, 8
    $region13: #{vae_forward.1} parent=1 // pred_fallthru
      _
    // Predicated region
    $region14: #{vae_forward.1} parent=1 // pred_check
      _
    $region15: #{vae_forward.1} parent=1 // pred_check_branch
      %43 = sbr.rel (0) target = $region17
    $region16: #{vae_forward.1} parent=1 // pred_region
      %44 = dma.done [#allocation3], 128
    $region17: #{vae_forward.1} parent=1 // pred_fallthru
      _
    // Predicated region
    $region18: #{vae_forward.1} parent=1 // pred_check
      _
    $region19: #{vae_forward.1} parent=1 // pred_check_branch
      %46 = sbr.rel (0) target = $region21
    $region20: #{vae_forward.1} parent=1 // pred_region
      %47 = dma.done [#allocation5], 128
    $region21: #{vae_forward.1} parent=1 // pred_fallthru
      _
    // Predicated region
    $region22: #{vae_forward.1} parent=1 // pred_check
      _
    $region23: #{vae_forward.1} parent=1 // pred_check_branch
      %49 = sbr.rel (0) target = $region25
    $region24: #{vae_forward.1} parent=1 // pred_region
      %50 = dma.done [#allocation5], 2432
    $region25: #{vae_forward.1} parent=1 // pred_fallthru
      _
    %v51 = vld [vmem:[#allocation6] sm:$0xff]
    %v52 = vld [vmem:[#allocation6 + $0x8] sm:$0xff]
    %v53 = vld [vmem:[#allocation6 + $0x10] sm:$0xff]
    %v54 = vld [vmem:[#allocation6 + $0x18] sm:$0xff]
    %v55 = vld [vmem:[#allocation6 + $0x20] sm:$0xff]
    %v56 = vld [vmem:[#allocation6 + $0x28] sm:$0xff]
    %v57 = vld [vmem:[#allocation6 + $0x30] sm:$0xff]
    %v58 = vld [vmem:[#allocation6 + $0x38] sm:$0xff]
    %v59 = vld [vmem:[#allocation6 + $0x40] sm:$0xff]
    %v60 = vld [vmem:[#allocation6 + $0x48] sm:$0xff]
    %v61 = vld [vmem:[#allocation6 + $0x50] sm:$0xff]
    %v62 = vld [vmem:[#allocation6 + $0x58] sm:$0xff]
    %v63 = vld [vmem:[#allocation6 + $0x60] sm:$0xff]
    %v64 = vld [vmem:[#allocation6 + $0x68] sm:$0xff]
    %v65 = vld [vmem:[#allocation6 + $0x70] sm:$0xff]
    %v66 = vld [vmem:[#allocation6 + $0x78] sm:$0xff]
    %v67 = vld [vmem:[#allocation6 + $0x80] sm:$0xff]
    %v68 = vld [vmem:[#allocation6 + $0x88] sm:$0xff]
    %v69 = vld [vmem:[#allocation6 + $0x90] sm:$0xff]
    %v70 = vld [vmem:[#allocation2] sm:$0xff]
    %v71 = vld [vmem:[#allocation4] sm:$0xff]
    %v72 = vlaneseq
    %v73 = vshrl.u32 %v72, 7
    %v74 = vsub.s32 0, %v73
    %v75 = vrot.slane %v69, %v74
    %vm76 = vcmask 523264
    %v78 = vsel %vm76, %v70, 0
    %80 = vmatprep.subr.mxu0 0.0
    %81 = vmatpush1.msra.mxu0 0.0
    %82 = vmatprep.subr.mxu0 0.0
    %83 = vmatpush1.msra.mxu0 0.0
    %84 = vmatprep.subr.mxu0 0.0
    %85 = vmatpush1.msra.mxu0 0.0
    %86 = vmatprep.subr.mxu0 0.0
    %87 = vmatpush1.msra.mxu0 0.0
    %88 = vmatprep.subr.mxu0 0.0
    %89 = vmatpush1.msra.mxu0 0.0
    %90 = vmatprep.subr.mxu0 0.0
    %91 = vmatpush1.msra.mxu0 0.0
    %92 = vmatprep.subr.mxu0 0.0
    %93 = vmatpush1.msra.mxu0 0.0
    %94 = vmatprep.subr.mxu0 0.0
    %95 = vmatpush1.msra.mxu0 0.0
    %96 = vmatprep.subr.mxu0 0.0
    %97 = vmatpush1.msra.mxu0 %v58
    %98 = vmatprep.subr.mxu0 0.0
    %99 = vmatpush1.msra.mxu0 %v57
    %100 = vmatprep.subr.mxu0 0.0
    %101 = vmatpush1.msra.mxu0 %v56
    %102 = vmatprep.subr.mxu0 0.0
    %103 = vmatpush1.msra.mxu0 %v55
    %104 = vmatprep.subr.mxu0 0.0
    %105 = vmatpush1.msra.mxu0 %v54
    %106 = vmatprep.subr.mxu0 0.0
    %107 = vmatpush1.msra.mxu0 %v53
    %108 = vmatprep.subr.mxu0 0.0
    %109 = vmatpush1.msra.mxu0 %v52
    %110 = vmatprep.subr.mxu0 0.0
    %111 = vmatpush1.msra.mxu0 %v51
    %112 = vmatprep.subr.mxu0 0.0
    %113 = vmatpush2.msra.mxu0 0.0
    %114 = vmatprep.subr.mxu0 0.0
    %115 = vmatpush2.msra.mxu0 0.0
    %116 = vmatprep.subr.mxu0 0.0
    %117 = vmatpush2.msra.mxu0 0.0
    %118 = vmatprep.subr.mxu0 0.0
    %119 = vmatpush2.msra.mxu0 0.0
    %120 = vmatprep.subr.mxu0 0.0
    %121 = vmatpush2.msra.mxu0 0.0
    %122 = vmatprep.subr.mxu0 0.0
    %123 = vmatpush2.msra.mxu0 0.0
    %124 = vmatprep.subr.mxu0 0.0
    %125 = vmatpush2.msra.mxu0 0.0
    %126 = vmatprep.subr.mxu0 0.0
    %127 = vmatpush2.msra.mxu0 0.0
    %128 = vmatprep.subr.mxu0 0.0
    %129 = vmatpush2.msra.mxu0 0.0
    %130 = vmatprep.subr.mxu0 0.0
    %131 = vmatpush2.msra.mxu0 0.0
    %132 = vmatprep.subr.mxu0 0.0
    %133 = vmatpush2.msra.mxu0 0.0
    %134 = vmatprep.subr.mxu0 0.0
    %135 = vmatpush2.msra.mxu0 0.0
    %136 = vmatprep.subr.mxu0 0.0
    %137 = vmatpush2.msra.mxu0 0.0
    %138 = vmatprep.subr.mxu0 0.0
    %139 = vmatpush2.msra.mxu0 0.0
    %140 = vmatprep.subr.mxu0 0.0
    %141 = vmatpush2.msra.mxu0 0.0
    %142 = vmatprep.subr.mxu0 0.0
    %143 = vmatpush2.msra.mxu0 0.0
    %144 = vmatprep.mubr.f32.mxu0 0.0
    %145 = vmatmul.mubr.f32.gmra.mxu0 %v78
    %v146 = vpop.f32.mrf.mxu0
    %v147 = vadd.f32 %v75, %v146
    %v148 = vpop.f32.mrf.mxu0
    %149 = vdwg.mxu0
    %v150 = vmax.f32 %v147, 0.0
    %v151 = vlaneseq
    %v152 = vshrl.u32 %v151, 7
    %v153 = vsub.s32 1, %v152
    %v154 = vrot.slane %v69, %v153
    %vm155 = vcmask 261120
    %v157 = vsel %vm155, %v150, 0
    %159 = vmatprep.subr.mxu0 0.0
    %160 = vmatpush1.msra.mxu0 0.0
    %161 = vmatprep.subr.mxu0 0.0
    %162 = vmatpush1.msra.mxu0 0.0
    %163 = vmatprep.subr.mxu0 0.0
    %164 = vmatpush1.msra.mxu0 0.0
    %165 = vmatprep.subr.mxu0 0.0
    %166 = vmatpush1.msra.mxu0 0.0
    %167 = vmatprep.subr.mxu0 0.0
    %168 = vmatpush1.msra.mxu0 0.0
    %169 = vmatprep.subr.mxu0 0.0
    %170 = vmatpush1.msra.mxu0 0.0
    %171 = vmatprep.subr.mxu0 0.0
    %172 = vmatpush1.msra.mxu0 0.0
    %173 = vmatprep.subr.mxu0 0.0
    %174 = vmatpush1.msra.mxu0 0.0
    %175 = vmatprep.subr.mxu0 0.0
    %176 = vmatpush1.msra.mxu0 0.0
    %177 = vmatprep.subr.mxu0 0.0
    %178 = vmatpush1.msra.mxu0 0.0
    %179 = vmatprep.subr.mxu0 0.0
    %180 = vmatpush1.msra.mxu0 0.0
    %181 = vmatprep.subr.mxu0 0.0
    %182 = vmatpush1.msra.mxu0 0.0
    %183 = vmatprep.subr.mxu0 0.0
    %184 = vmatpush1.msra.mxu0 %v62
    %185 = vmatprep.subr.mxu0 0.0
    %186 = vmatpush1.msra.mxu0 %v61
    %187 = vmatprep.subr.mxu0 0.0
    %188 = vmatpush1.msra.mxu0 %v60
    %189 = vmatprep.subr.mxu0 0.0
    %190 = vmatpush1.msra.mxu0 %v59
    %191 = vmatprep.subr.mxu0 0.0
    %192 = vmatpush2.msra.mxu0 0.0
    %193 = vmatprep.subr.mxu0 0.0
    %194 = vmatpush2.msra.mxu0 0.0
    %195 = vmatprep.subr.mxu0 0.0
    %196 = vmatpush2.msra.mxu0 0.0
    %197 = vmatprep.subr.mxu0 0.0
    %198 = vmatpush2.msra.mxu0 0.0
    %199 = vmatprep.subr.mxu0 0.0
    %200 = vmatpush2.msra.mxu0 0.0
    %201 = vmatprep.subr.mxu0 0.0
    %202 = vmatpush2.msra.mxu0 0.0
    %203 = vmatprep.subr.mxu0 0.0
    %204 = vmatpush2.msra.mxu0 0.0
    %205 = vmatprep.subr.mxu0 0.0
    %206 = vmatpush2.msra.mxu0 0.0
    %207 = vmatprep.subr.mxu0 0.0
    %208 = vmatpush2.msra.mxu0 0.0
    %209 = vmatprep.subr.mxu0 0.0
    %210 = vmatpush2.msra.mxu0 0.0
    %211 = vmatprep.subr.mxu0 0.0
    %212 = vmatpush2.msra.mxu0 0.0
    %213 = vmatprep.subr.mxu0 0.0
    %214 = vmatpush2.msra.mxu0 0.0
    %215 = vmatprep.subr.mxu0 0.0
    %216 = vmatpush2.msra.mxu0 0.0
    %217 = vmatprep.subr.mxu0 0.0
    %218 = vmatpush2.msra.mxu0 0.0
    %219 = vmatprep.subr.mxu0 0.0
    %220 = vmatpush2.msra.mxu0 0.0
    %221 = vmatprep.subr.mxu0 0.0
    %222 = vmatpush2.msra.mxu0 0.0
    %223 = vmatprep.mubr.f32.mxu0 0.0
    %224 = vmatmul.mubr.f32.gmra.mxu0 %v157
    %v225 = vpop.f32.mrf.mxu0
    %v226 = vadd.f32 %v154, %v225
    %v227 = vpop.f32.mrf.mxu0
    %228 = vdwg.mxu0
    %v229 = vmul.f32 %v226, 0.5
    %v230 = vmul.f32 %v229, 1.442695
    %v231 = vpow.pop %v230
    %233 = vrot.lane.b32.xlu0 %v231, 112
    %v234 = vpop.permute.xlu0 %233
    %v236 = vmul.f32 %v71, %v234
    %v237 = vadd.f32 %v236, %v226
    %v238 = vlaneseq
    %v239 = vshrl.u32 %v238, 7
    %v240 = vsub.s32 2, %v239
    %v241 = vrot.slane %v69, %v240
    %vm242 = vcmask 130048
    %v244 = vsel %vm242, %v237, 0
    %246 = vmatprep.subr.mxu0 0.0
    %247 = vmatpush1.msra.mxu0 0.0
    %248 = vmatprep.subr.mxu0 0.0
    %249 = vmatpush1.msra.mxu0 0.0
    %250 = vmatprep.subr.mxu0 0.0
    %251 = vmatpush1.msra.mxu0 0.0
    %252 = vmatprep.subr.mxu0 0.0
    %253 = vmatpush1.msra.mxu0 0.0
    %254 = vmatprep.subr.mxu0 0.0
    %255 = vmatpush1.msra.mxu0 0.0
    %256 = vmatprep.subr.mxu0 0.0
    %257 = vmatpush1.msra.mxu0 0.0
    %258 = vmatprep.subr.mxu0 0.0
    %259 = vmatpush1.msra.mxu0 0.0
    %260 = vmatprep.subr.mxu0 0.0
    %261 = vmatpush1.msra.mxu0 0.0
    %262 = vmatprep.subr.mxu0 0.0
    %263 = vmatpush1.msra.mxu0 0.0
    %264 = vmatprep.subr.mxu0 0.0
    %265 = vmatpush1.msra.mxu0 0.0
    %266 = vmatprep.subr.mxu0 0.0
    %267 = vmatpush1.msra.mxu0 0.0
    %268 = vmatprep.subr.mxu0 0.0
    %269 = vmatpush1.msra.mxu0 0.0
    %270 = vmatprep.subr.mxu0 0.0
    %271 = vmatpush1.msra.mxu0 0.0
    %272 = vmatprep.subr.mxu0 0.0
    %273 = vmatpush1.msra.mxu0 0.0
    %274 = vmatprep.subr.mxu0 0.0
    %275 = vmatpush1.msra.mxu0 %v64
    %276 = vmatprep.subr.mxu0 0.0
    %277 = vmatpush1.msra.mxu0 %v63
    %278 = vmatprep.subr.mxu0 0.0
    %279 = vmatpush2.msra.mxu0 0.0
    %280 = vmatprep.subr.mxu0 0.0
    %281 = vmatpush2.msra.mxu0 0.0
    %282 = vmatprep.subr.mxu0 0.0
    %283 = vmatpush2.msra.mxu0 0.0
    %284 = vmatprep.subr.mxu0 0.0
    %285 = vmatpush2.msra.mxu0 0.0
    %286 = vmatprep.subr.mxu0 0.0
    %287 = vmatpush2.msra.mxu0 0.0
    %288 = vmatprep.subr.mxu0 0.0
    %289 = vmatpush2.msra.mxu0 0.0
    %290 = vmatprep.subr.mxu0 0.0
    %291 = vmatpush2.msra.mxu0 0.0
    %292 = vmatprep.subr.mxu0 0.0
    %293 = vmatpush2.msra.mxu0 0.0
    %294 = vmatprep.subr.mxu0 0.0
    %295 = vmatpush2.msra.mxu0 0.0
    %296 = vmatprep.subr.mxu0 0.0
    %297 = vmatpush2.msra.mxu0 0.0
    %298 = vmatprep.subr.mxu0 0.0
    %299 = vmatpush2.msra.mxu0 0.0
    %300 = vmatprep.subr.mxu0 0.0
    %301 = vmatpush2.msra.mxu0 0.0
    %302 = vmatprep.subr.mxu0 0.0
    %303 = vmatpush2.msra.mxu0 0.0
    %304 = vmatprep.subr.mxu0 0.0
    %305 = vmatpush2.msra.mxu0 0.0
    %306 = vmatprep.subr.mxu0 0.0
    %307 = vmatpush2.msra.mxu0 0.0
    %308 = vmatprep.subr.mxu0 0.0
    %309 = vmatpush2.msra.mxu0 0.0
    %310 = vmatprep.mubr.f32.mxu0 0.0
    %311 = vmatmul.mubr.f32.gmra.mxu0 %v244
    %v312 = vpop.f32.mrf.mxu0
    %v313 = vadd.f32 %v241, %v312
    %v314 = vpop.f32.mrf.mxu0
    %315 = vdwg.mxu0
    %v316 = vmax.f32 %v313, 0.0
    %v317 = vlaneseq
    %v318 = vshrl.u32 %v317, 7
    %v319 = vsub.s32 3, %v318
    %v320 = vrot.slane %v69, %v319
    %v322 = vsel %vm155, %v316, 0
    %324 = vmatprep.subr.mxu0 0.0
    %325 = vmatpush1.msra.mxu0 0.0
    %326 = vmatprep.subr.mxu0 0.0
    %327 = vmatpush1.msra.mxu0 0.0
    %328 = vmatprep.subr.mxu0 0.0
    %329 = vmatpush1.msra.mxu0 0.0
    %330 = vmatprep.subr.mxu0 0.0
    %331 = vmatpush1.msra.mxu0 0.0
    %332 = vmatprep.subr.mxu0 0.0
    %333 = vmatpush1.msra.mxu0 0.0
    %334 = vmatprep.subr.mxu0 0.0
    %335 = vmatpush1.msra.mxu0 0.0
    %336 = vmatprep.subr.mxu0 0.0
    %337 = vmatpush1.msra.mxu0 0.0
    %338 = vmatprep.subr.mxu0 0.0
    %339 = vmatpush1.msra.mxu0 0.0
    %340 = vmatprep.subr.mxu0 0.0
    %341 = vmatpush1.msra.mxu0 0.0
    %342 = vmatprep.subr.mxu0 0.0
    %343 = vmatpush1.msra.mxu0 0.0
    %344 = vmatprep.subr.mxu0 0.0
    %345 = vmatpush1.msra.mxu0 0.0
    %346 = vmatprep.subr.mxu0 0.0
    %347 = vmatpush1.msra.mxu0 0.0
    %348 = vmatprep.subr.mxu0 0.0
    %349 = vmatpush1.msra.mxu0 %v68
    %350 = vmatprep.subr.mxu0 0.0
    %351 = vmatpush1.msra.mxu0 %v67
    %352 = vmatprep.subr.mxu0 0.0
    %353 = vmatpush1.msra.mxu0 %v66
    %354 = vmatprep.subr.mxu0 0.0
    %355 = vmatpush1.msra.mxu0 %v65
    %356 = vmatprep.subr.mxu0 0.0
    %357 = vmatpush2.msra.mxu0 0.0
    %358 = vmatprep.subr.mxu0 0.0
    %359 = vmatpush2.msra.mxu0 0.0
    %360 = vmatprep.subr.mxu0 0.0
    %361 = vmatpush2.msra.mxu0 0.0
    %362 = vmatprep.subr.mxu0 0.0
    %363 = vmatpush2.msra.mxu0 0.0
    %364 = vmatprep.subr.mxu0 0.0
    %365 = vmatpush2.msra.mxu0 0.0
    %366 = vmatprep.subr.mxu0 0.0
    %367 = vmatpush2.msra.mxu0 0.0
    %368 = vmatprep.subr.mxu0 0.0
    %369 = vmatpush2.msra.mxu0 0.0
    %370 = vmatprep.subr.mxu0 0.0
    %371 = vmatpush2.msra.mxu0 0.0
    %372 = vmatprep.subr.mxu0 0.0
    %373 = vmatpush2.msra.mxu0 0.0
    %374 = vmatprep.subr.mxu0 0.0
    %375 = vmatpush2.msra.mxu0 0.0
    %376 = vmatprep.subr.mxu0 0.0
    %377 = vmatpush2.msra.mxu0 0.0
    %378 = vmatprep.subr.mxu0 0.0
    %379 = vmatpush2.msra.mxu0 0.0
    %380 = vmatprep.subr.mxu0 0.0
    %381 = vmatpush2.msra.mxu0 0.0
    %382 = vmatprep.subr.mxu0 0.0
    %383 = vmatpush2.msra.mxu0 0.0
    %384 = vmatprep.subr.mxu0 0.0
    %385 = vmatpush2.msra.mxu0 0.0
    %386 = vmatprep.subr.mxu0 0.0
    %387 = vmatpush2.msra.mxu0 0.0
    %388 = vmatprep.mubr.f32.mxu0 0.0
    %389 = vmatmul.mubr.f32.gmra.mxu0 %v322
    %v390 = vpop.f32.mrf.mxu0
    %v391 = vadd.f32 %v320, %v390
    %v392 = vpop.f32.mrf.mxu0
    %393 = vdwg.mxu0
    %v394 = vsub.f32 0.0, %v391
    %v395 = vmul.f32 %v394, 1.442695
    %v396 = vpow.pop %v395
    %v397 = vadd.f32 %v396, 1.0
    %v398 = vrcp.pop %v397
    %400 = vrot.lane.b32.xlu0 %v226, 64
    %v401 = vpop.permute.xlu0 %400
    %v403 = vsel %vm76, %v398, %v401
    %vm404 = vcmask 785408
    %v405 = vsel %vm404, %v403, 0.0
    %406 = vst [vmem:[%s3] sm:$0xff] %v405
    // Predicated region
    $region26: #{vae_forward.1} parent=1 // pred_check
      _
    $region27: #{vae_forward.1} parent=1 // pred_check_branch
      %408 = sbr.rel (0) target = $region29
    $region28: #{vae_forward.1} parent=1 // pred_region
      _
    $region29: #{vae_forward.1} parent=1 // pred_fallthru
      _
    // Predicated region
    $region30: #{vae_forward.1} parent=1 // pred_check
      _
    $region31: #{vae_forward.1} parent=1 // pred_check_branch
      %410 = sbr.rel (0) target = $region33
    $region32: #{vae_forward.1} parent=1 // pred_region
      _
    $region33: #{vae_forward.1} parent=1 // pred_fallthru
      _
    %411 = vsyncpa [#allocation3], 1
    %412 = vsyncpa [#allocation5], 1

</llo_original>
